<compile_context>
chip_gen: v6e
topology: v6e:2x2x1
jax: 0.10.0
libtpu: 0.0.40
codegen_flags: <defaults>
</compile_context>

<pallas_src>
import jax
import jax.numpy as jnp
from jax import lax
from jax.experimental import pallas as pl
from jax.experimental.pallas import tpu as pltpu


def _round_up(x, m):
    return ((x + m - 1) // m) * m


def _cdiv(a, b):
    return (a + b - 1) // b


def _choose_tn(n, tn_target):
    """Lane-dense n-tile; prefer >= 2 tiles so both v7x TensorCores are used."""
    n128 = _round_up(n, 128)
    if n128 <= 1024:
        return min(n128, tn_target)
    if n128 <= 2 * tn_target:
        return max(512, _round_up(_cdiv(n128, 2), 128))
    return tn_target


def _make_kernel(d, td):
    ragged_d = (d % td) != 0

    def kernel(s_ref, x_ref, o_ref):
        # s_ref: (d_pad, 1) resident; x_ref: (td, tn) streamed; o_ref: (1, tn) f32,
        # resident across the reduction axis (its block index ignores k).
        k = pl.program_id(1)

        @pl.when(k == 0)
        def _():
            o_ref[...] = jnp.zeros_like(o_ref)

        start = pl.multiple_of(k * td, 8)
        s_tile = s_ref[pl.ds(start, td), :].astype(jnp.float32)   # (td, 1)
        x_blk = x_ref[...].astype(jnp.float32)                    # (td, tn)

        if ragged_d:
            # Mask rows past the true d (last-tile OOB reads are garbage; a
            # select avoids 0*NaN propagation).
            row = lax.broadcasted_iota(jnp.int32, (td, 1), 0) + k * td
            x_blk = jnp.where(row < d, x_blk, 0.0)

        # VPU broadcast-multiply + XLU cross-sublane reduce, hidden under DMA.
        o_ref[...] += jnp.sum(x_blk * s_tile, axis=0, keepdims=True)

    return kernel


def s_module_forward(s, x, *, tn_target=4096, td_target=512):
    """Computes s @ x with a tiled, pipelined Pallas TPU kernel.

    s: (d,) parameter, x: (d, n) input -> (n,) float32.
    """
    (d,) = s.shape
    d_x, n = x.shape
    assert d == d_x, f"dim mismatch: s has d={d}, x has d={d_x}"

    tn = _choose_tn(n, tn_target)              # multiple of 128
    td = min(td_target, _round_up(d, 8))       # multiple of 8

    num_n = _cdiv(n, tn)
    num_k = _cdiv(d, td)
    d_pad = num_k * td

    # Only pad s (trivial); x is consumed in place -- no full padded copy.
    s_col = s.reshape(d, 1)
    if d_pad != d:
        s_col = jnp.zeros((d_pad, 1), s.dtype).at[:d, :].set(s_col)

    out = pl.pallas_call(
        _make_kernel(d, td),
        out_shape=jax.ShapeDtypeStruct((1, n), jnp.float32),
        grid=(num_n, num_k),                   # (n tiles [parallel], d tiles [reduction])
        in_specs=[
            pl.BlockSpec((d_pad, 1), lambda j, k: (0, 0)),   # s: resident, fetched once
            pl.BlockSpec((td, tn), lambda j, k: (k, j)),     # x: streamed, double-buffered
        ],
        out_specs=pl.BlockSpec((1, tn), lambda j, k: (0, j)),
        compiler_params=pltpu.CompilerParams(
            dimension_semantics=("parallel", "arbitrary"),
            vmem_limit_bytes=32 * 1024 * 1024,   # explicit so 8 MiB tiles fit on v5e too
        ),
    )(s_col, x)

    return out[0]


if __name__ == "__main__":
    # Module config (mirrors sModule(m, d)): deterministic parameter init.
    m = 2.0
    d = 48
    n = 200  # not a multiple of 128 -> exercises the ragged-n (partial block) path

    # Parameter: s = ones(d) * m / d   (exactly as in sModule.__init__)
    s = jnp.ones((d,), dtype=jnp.float32) * (m / d)

    key = jax.random.PRNGKey(0)
    x = jax.random.normal(key, (d, n), dtype=jnp.float32)

    out = s_module_forward(s, x)
    out = jax.block_until_ready(out)

    ref = s @ x
    assert out.shape == (n,)
    assert jnp.allclose(out, ref, atol=1e-5, rtol=1e-5), "mismatch vs reference"

    # Extra sanity check: ragged d (d not a multiple of 8/td) -> in-kernel row mask.
    d2, n2 = 100, 640
    s2 = jnp.ones((d2,), dtype=jnp.float32) * (m / d2)
    x2 = jax.random.normal(jax.random.PRNGKey(1), (d2, n2), dtype=jnp.float32)
    out2 = jax.block_until_ready(s_module_forward(s2, x2))
    assert jnp.allclose(out2, s2 @ x2, atol=1e-5, rtol=1e-5), "mismatch (ragged d)"

    print("KERNEL_OK")
</pallas_src>

<mosaic_0001>
module attributes {stable_mosaic.version = 11 : i64} {
  func.func @kernel(%arg0: i32, %arg1: i32, %arg2: memref<48x1xf32, #tpu.memory_space<vmem>>, %arg3: memref<48x256xf32, #tpu.memory_space<vmem>>, %arg4: memref<1x256xf32, #tpu.memory_space<vmem>>) attributes {dimension_semantics = [#tpu.dimension_semantics<parallel>, #tpu.dimension_semantics<arbitrary>], iteration_bounds = array<i64: 1, 1>, scalar_prefetch = 0 : i64, scratch_operands = 0 : i64, tpu.core_type = #tpu.core_type<tc>, window_params = [{pipeline_mode = #tpu.pipeline_mode<synchronous>, transform_indices = @transform_0, window_bounds = array<i64: 48, 1>}, {transform_indices = @transform_1, window_bounds = array<i64: 48, 256>}, {transform_indices = @transform_2, window_bounds = array<i64: 1, 256>}]} {
    %c0_i32 = arith.constant 0 : i32
    %0 = arith.cmpi eq, %arg1, %c0_i32 : i32
    %1 = arith.extui %0 : i1 to i32
    %c0_i32_0 = arith.constant 0 : i32
    %2 = arith.cmpi ne, %1, %c0_i32_0 : i32
    scf.if %2 {
      %cst_7 = arith.constant 0.000000e+00 : f32
      %15 = vector.broadcast %cst_7 : f32 to vector<1x256xf32>
      %c0_8 = arith.constant 0 : index
      %c0_9 = arith.constant 0 : index
      %16 = vector.load %arg4[%c0_8, %c0_9] : memref<1x256xf32, #tpu.memory_space<vmem>>, vector<1x256xf32>
      tpu.vector_store %arg4[%c0_8, %c0_9], %15 {strides = array<i32>} : memref<1x256xf32, #tpu.memory_space<vmem>>, vector<1x256xf32>,
    } else {
    }
    %c48_i32 = arith.constant 48 : i32
    %3 = arith.muli %arg1, %c48_i32 : i32
    %4 = tpu.assume_multiple %3, 8 : i32
    %5 = arith.index_cast %4 : i32 to index
    %c0 = arith.constant 0 : index
    %6 = vector.load %arg2[%5, %c0] : memref<48x1xf32, #tpu.memory_space<vmem>>, vector<48x1xf32>
    %c0_1 = arith.constant 0 : index
    %c0_2 = arith.constant 0 : index
    %7 = vector.load %arg3[%c0_1, %c0_2] : memref<48x256xf32, #tpu.memory_space<vmem>>, vector<48x256xf32>
    %c0_3 = arith.constant 0 : index
    %c0_4 = arith.constant 0 : index
    %8 = vector.load %arg4[%c0_3, %c0_4] : memref<1x256xf32, #tpu.memory_space<vmem>>, vector<1x256xf32>
    %9 = vector.broadcast %6 : vector<48x1xf32> to vector<48x256xf32>
    %10 = arith.mulf %7, %9 : vector<48x256xf32>
    %cst = arith.constant dense<0.000000e+00> : vector<256xf32>
    %11 = vector.multi_reduction <add>, %10, %cst [0] : vector<48x256xf32> to vector<256xf32>
    %12 = vector.shape_cast %11 : vector<256xf32> to vector<1x256xf32>
    %13 = arith.addf %8, %12 : vector<1x256xf32>
    %c0_5 = arith.constant 0 : index
    %c0_6 = arith.constant 0 : index
    %14 = vector.load %arg4[%c0_5, %c0_6] : memref<1x256xf32, #tpu.memory_space<vmem>>, vector<1x256xf32>
    tpu.vector_store %arg4[%c0_5, %c0_6], %13 {strides = array<i32>} : memref<1x256xf32, #tpu.memory_space<vmem>>, vector<1x256xf32>,
    return
  }
  func.func @transform_0(%arg0: i32, %arg1: i32) -> (i32, i32) {
    %c0_i32 = arith.constant 0 : i32
    %c0_i32_0 = arith.constant 0 : i32
    %c0_i32_1 = arith.constant 0 : i32
    return %c0_i32, %c0_i32_0 : i32, i32
  }
  func.func @transform_1(%arg0: i32, %arg1: i32) -> (i32, i32) {
    %c0_i32 = arith.constant 0 : i32
    return %arg1, %arg0 : i32, i32
  }
  func.func @transform_2(%arg0: i32, %arg1: i32) -> (i32, i32) {
    %c0_i32 = arith.constant 0 : i32
    %c0_i32_0 = arith.constant 0 : i32
    return %c0_i32, %arg0 : i32, i32
  }
}

</mosaic_0001>

<llo_original>
// kernel: tpu_custom_call.1
$region0: #{tpu_custom_call.1}
  #allocation0 [shape = 'u32[]', space=smem, size = 0x4, offset = 0x4, fixed_abs, tag = 'smem constant byte address 0x4 - core index']
  #allocation1 [shape = 'u32[144,128]{1,0:T(1,128)}', space=vmem, size = 0x12000, scoped, tag = 'internal scratch']
  %s0 = inlined_call_operand.vmem [shape: f32[48,1], index: 0, kind: input, shape index: {}]
  %s1 = inlined_call_operand.hbm [shape: f32[48,200], index: 1, kind: input, shape index: {}]
  %s2 = inlined_call_operand.hbm [shape: f32[1,200], index: 2, kind: output, shape index: {}]
  %s3 = sld [smem:[#allocation0]]
  $region26: #{tpu_custom_call.1} parent=0
    _
  %s5 = ssub.s32 1, %s3
  %s6 = scalar_select 0, %s5, %s3
  $region1: #{tpu_custom_call.1} parent=0
    #allocation2 [shape = 'u8[49152]{0}', space=vmem, size = 0xc000, scoped, tag = 'input window, operand 1, single buffered']
    #allocation3 [shape = 's32[1]{0}', space=sflag, size = 0x4, scoped, tag = 'scoped memory for tpu_custom_call.1']
    #allocation4 [shape = 's32[1]{0}', space=sflag, size = 0x4, scoped, tag = 'scoped memory for tpu_custom_call.1']
    #allocation5 [shape = 'u8[1024]{0}', space=vmem, size = 0x400, scoped, tag = 'output window, operand 0, single buffered']
    %7 = vsyncpa [#allocation3], 0
    %8 = vsyncpa [#allocation4], 0
    // Predicated region
    $region2: #{tpu_custom_call.1} parent=1 // pred_check
      _
    $region3: #{tpu_custom_call.1} parent=1 // pred_check_branch
      %10 = sbr.rel (0) target = $region5
    $region4: #{tpu_custom_call.1} parent=1 // pred_region
      _
    $region5: #{tpu_custom_call.1} parent=1 // pred_fallthru
      _
    // Predicated region
    $region6: #{tpu_custom_call.1} parent=1 // pred_check
      _
    $region7: #{tpu_custom_call.1} parent=1 // pred_check_branch
      %12 = sbr.rel (0) target = $region9
    $region8: #{tpu_custom_call.1} parent=1 // pred_region
      %s14 = ssub.s32 1536, 1536
      %15 = vsyncadd [#allocation3], %s14
      %s16 = sshll.u32 [#allocation2], 4
      %s17 = int_to_ptr.vmem [resolvable:$true] %s16
      %22 = dma.hbm_to_vmem [thread:$0]  %s1, 1536, %s17, [#allocation3], 256, 256, 16
    $region9: #{tpu_custom_call.1} parent=1 // pred_fallthru
      _
    // Predicated region
    $region10: #{tpu_custom_call.1} parent=1 // pred_check
      _
    $region11: #{tpu_custom_call.1} parent=1 // pred_check_branch
      %24 = sbr.rel (0) target = $region13
    $region12: #{tpu_custom_call.1} parent=1 // pred_region
      %25 = dma.done [#allocation3], 1536
    $region13: #{tpu_custom_call.1} parent=1 // pred_fallthru
      _
    %p26 = scmp.eq.s32.totalorder 0, 0
    // Predicated region
    $region14: #{tpu_custom_call.1} parent=1 // pred_check
      %p27 = pneg %p26
    $region15: #{tpu_custom_call.1} parent=1 // pred_check_branch
      %29 = sbr.rel (%p27) target = $region17
    $region16: #{tpu_custom_call.1} parent=1 // pred_region
      %v30 = vlaneseq
      %vm31 = vcmp.ge.s32.totalorder %v30, 0
      %vm32 = vcmp.lt.s32.totalorder %v30, 256
      %vm33 = vmand %vm31, %vm32
      %34 = vst.msk [vmem:[#allocation5] sm:$0x3] %vm33, 0.0
    $region17: #{tpu_custom_call.1} parent=1 // pred_fallthru
      _
    %s35 = smul.u32 0, 48
    %s36 = scalar_lea.vmem %s0, %s35
    %v37 = vld [vmem:[%s36] sm:$0xff]
    %v38 = vld [vmem:[%s36 + $0x8] sm:$0xff]
    %v39 = vld [vmem:[%s36 + $0x10] sm:$0xff]
    %v40 = vld [vmem:[%s36 + $0x18] sm:$0xff]
    %v41 = vld [vmem:[%s36 + $0x20] sm:$0xff]
    %v42 = vld [vmem:[%s36 + $0x28] sm:$0xff]
    %v43 = vld [vmem:[#allocation2] sm:$0xff]
    %v44 = vld [vmem:[#allocation2 + $0x8] sm:$0xff]
    %v45 = vld [vmem:[#allocation2 + $0x10] sm:$0xff]
    %v46 = vld [vmem:[#allocation2 + $0x18] sm:$0xff]
    %v47 = vld [vmem:[#allocation2 + $0x20] sm:$0xff]
    %v48 = vld [vmem:[#allocation2 + $0x28] sm:$0xff]
    %v49 = vld [vmem:[#allocation2 + $0x30] sm:$0xff]
    %v50 = vld [vmem:[#allocation2 + $0x38] sm:$0xff]
    %v51 = vld [vmem:[#allocation2 + $0x40] sm:$0xff]
    %v52 = vld [vmem:[#allocation2 + $0x48] sm:$0xff]
    %v53 = vld [vmem:[#allocation2 + $0x50] sm:$0xff]
    %v54 = vld [vmem:[#allocation2 + $0x58] sm:$0xff]
    %v55 = vld [vmem:[#allocation5] sm:$0x3]
    %57 = vset.pattern.permute.xlu0 0
    %58 = vperm.xlu0 %57, %v37
    %v59 = vpop.permute.xlu0 %58
    %62 = vset.pattern.permute.xlu0 0
    %63 = vperm.xlu0 %62, %v38
    %v64 = vpop.permute.xlu0 %63
    %67 = vset.pattern.permute.xlu0 0
    %68 = vperm.xlu0 %67, %v39
    %v69 = vpop.permute.xlu0 %68
    %72 = vset.pattern.permute.xlu0 0
    %73 = vperm.xlu0 %72, %v40
    %v74 = vpop.permute.xlu0 %73
    %77 = vset.pattern.permute.xlu0 0
    %78 = vperm.xlu0 %77, %v41
    %v79 = vpop.permute.xlu0 %78
    %82 = vset.pattern.permute.xlu0 0
    %83 = vperm.xlu0 %82, %v42
    %v84 = vpop.permute.xlu0 %83
    %v86 = vmul.f32 %v43, %v59
    %v87 = vmul.f32 %v44, %v59
    %v88 = vmul.f32 %v45, %v64
    %v89 = vmul.f32 %v46, %v64
    %v90 = vmul.f32 %v47, %v69
    %v91 = vmul.f32 %v48, %v69
    %v92 = vmul.f32 %v49, %v74
    %v93 = vmul.f32 %v50, %v74
    %v94 = vmul.f32 %v51, %v79
    %v95 = vmul.f32 %v52, %v79
    %v96 = vmul.f32 %v53, %v84
    %v97 = vmul.f32 %v54, %v84
    %v98 = vadd.f32 %v86, %v88
    %v99 = vadd.f32 %v98, %v90
    %v100 = vadd.f32 %v99, %v92
    %v101 = vadd.f32 %v100, %v94
    %v102 = vadd.f32 %v101, %v96
    %v103 = vrot.slane %v102, 4
    %v104 = vadd.f32 %v102, %v103
    %v105 = vrot.slane %v104, 2
    %v106 = vadd.f32 %v104, %v105
    %v107 = vrot.slane %v106, 1
    %v108 = vadd.f32 %v106, %v107
    %v109 = vadd.f32 %v87, %v89
    %v110 = vadd.f32 %v109, %v91
    %v111 = vadd.f32 %v110, %v93
    %v112 = vadd.f32 %v111, %v95
    %v113 = vadd.f32 %v112, %v97
    %v114 = vrot.slane %v113, 4
    %v115 = vadd.f32 %v113, %v114
    %v116 = vrot.slane %v115, 2
    %v117 = vadd.f32 %v115, %v116
    %v118 = vrot.slane %v117, 1
    %v119 = vadd.f32 %v117, %v118
    %v122 = vcombine.low %v108, %v119
    %v124 = vunpack.c.l.s4 1966171168
    %v125 = vunpack.c.0.s8 %v124
    %v126 = vlaneseq
    %v127 = vshrl.u32 %v126, 7
    %v128 = vsub.s32 %v125, %v127
    %v129 = vrot.slane %v122, %v128
    %v131 = vunpack.c.l.s4 1966171168
    %v132 = vunpack.c.0.s8 %v131
    %v133 = vlaneseq
    %v134 = vshrl.u32 %v133, 7
    %v135 = vsub.s32 %v132, %v134
    %v136 = vrot.slane %v129, %v135
    %v138 = vadd.f32 %v55, %v136
    %v139 = vlaneseq
    %vm140 = vcmp.ge.s32.totalorder %v139, 0
    %vm141 = vcmp.lt.s32.totalorder %v139, 256
    %vm142 = vmand %vm140, %vm141
    %143 = vst.msk [vmem:[#allocation5] sm:$0x3] %vm142, %v138
    // Predicated region
    $region18: #{tpu_custom_call.1} parent=1 // pred_check
      _
    $region19: #{tpu_custom_call.1} parent=1 // pred_check_branch
      %145 = sbr.rel (0) target = $region21
    $region20: #{tpu_custom_call.1} parent=1 // pred_region
      %s147 = ssub.s32 32, 32
      %148 = vsyncadd [#allocation4], %s147
      %s150 = sshll.u32 [#allocation5], 4
      %s151 = int_to_ptr.vmem [resolvable:$true] %s150
      %153 = dma.vmem_to_hbm [thread:$0]  %s151, 32, %s2, [#allocation4]
    $region21: #{tpu_custom_call.1} parent=1 // pred_fallthru
      _
    // Predicated region
    $region22: #{tpu_custom_call.1} parent=1 // pred_check
      _
    $region23: #{tpu_custom_call.1} parent=1 // pred_check_branch
      %155 = sbr.rel (0) target = $region25
    $region24: #{tpu_custom_call.1} parent=1 // pred_region
      %156 = dma.done [#allocation4], 32
    $region25: #{tpu_custom_call.1} parent=1 // pred_fallthru
      _
    %157 = vsyncpa [#allocation3], 1
    %158 = vsyncpa [#allocation4], 1

</llo_original>
